<compile_context>
chip_gen: v7x
topology: tpu7x:2x2x1
jax: 0.10.0
libtpu: 0.0.40
codegen_flags: <defaults>
</compile_context>

<pallas_src>
import functools
import math

import jax
import jax.numpy as jnp
from jax.experimental import pallas as pl
from jax.experimental.pallas import tpu as pltpu


# ---------------------------------------------------------------------------
# Kernels
# ---------------------------------------------------------------------------
def _pe_add_kernel(x_ref, pe_ref, o_ref, *, batch):
    # x_ref / o_ref: (TILE_S, B*D)   pe_ref: (TILE_S, D)
    pe_wide = jnp.tile(pe_ref[...], (1, batch))            # broadcast over batch
    o_ref[...] = (x_ref[...] + pe_wide).astype(o_ref.dtype)


def _pe_add_dropout_kernel(x_ref, pe_ref, bits_ref, o_ref, *, batch, dropout_p):
    # Inverted dropout with keep-prob (1 - p), decided by an integer threshold
    # compare on raw uint32 bits (no float-uniform construction).
    pe_wide = jnp.tile(pe_ref[...], (1, batch))
    val = x_ref[...] + pe_wide
    threshold = jnp.uint32(min(int(round(dropout_p * 2.0 ** 32)), 2 ** 32 - 1))
    keep = bits_ref[...] >= threshold                       # P(keep) = 1 - p
    scale = jnp.asarray(1.0 / (1.0 - dropout_p), val.dtype)
    o_ref[...] = jnp.where(keep, val * scale, jnp.zeros_like(val)).astype(o_ref.dtype)


# ---------------------------------------------------------------------------
# Buffer construction — mirrors PositionalEncoding.__init__
# ---------------------------------------------------------------------------
def make_pos_encoding(dim_model: int, max_len: int, dtype=jnp.float32) -> jnp.ndarray:
    positions = jnp.arange(max_len, dtype=jnp.float32)[:, None]                 # (L, 1)
    division_term = jnp.exp(
        jnp.arange(0, dim_model, 2, dtype=jnp.float32) * (-math.log(10000.0) / dim_model)
    )                                                                            # (D/2,)
    pe = jnp.zeros((max_len, dim_model), jnp.float32)
    pe = pe.at[:, 0::2].set(jnp.sin(positions * division_term))
    pe = pe.at[:, 1::2].set(jnp.cos(positions * division_term))
    # unsqueeze(0).transpose(0, 1) -> (max_len, 1, dim_model)
    return pe[:, None, :].astype(dtype)


# ---------------------------------------------------------------------------
# Tile sizing: ~2 MiB per x block -> with double buffering of x/out/(bits)+pe
# the footprint stays well under the 32 MiB scoped VMEM default on all chips
# (including v7x's 64 MiB physical VMEM).
# ---------------------------------------------------------------------------
def _pick_tile_s(seq_len: int, row_bytes: int, target_bytes: int = 2 * 1024 * 1024) -> int:
    if seq_len <= 8:
        return seq_len                       # block dim == full array dim is allowed
    t = min(seq_len, max(1, target_bytes // max(1, row_bytes)))
    if t >= seq_len:
        return seq_len
    return max(8, (t // 8) * 8)              # keep the sublane dim a multiple of 8


# ---------------------------------------------------------------------------
# Forward wrapper
# ---------------------------------------------------------------------------
def positional_encoding_forward(token_embedding, pos_encoding, *,
                                dropout_p=0.1, train=False, rng_key=None):
    S, B, D = token_embedding.shape
    pe = pos_encoding[:S]                                            # (S, 1, D) glue slice
    out_dtype = jnp.result_type(token_embedding.dtype, pe.dtype)     # match torch promotion

    # Lane/sublane-dense presentation (free reshapes on contiguous arrays).
    x2d = token_embedding.reshape(S, B * D)
    pe2d = pe.reshape(S, D).astype(out_dtype)                        # cast once at setup

    row_bytes = B * D * jnp.dtype(out_dtype).itemsize
    tile_s = _pick_tile_s(S, row_bytes)
    grid = (pl.cdiv(S, tile_s),)

    x_spec = pl.BlockSpec((tile_s, B * D), lambda i: (i, 0))
    pe_spec = pl.BlockSpec((tile_s, D), lambda i: (i, 0))
    bits_spec = pl.BlockSpec((tile_s, B * D), lambda i: (i, 0))
    out_spec = pl.BlockSpec((tile_s, B * D), lambda i: (i, 0))
    out_shape = jax.ShapeDtypeStruct((S, B * D), out_dtype)

    compiler_params = pltpu.CompilerParams(
        dimension_semantics=("parallel",),        # shard seq tiles across v7x's 2 TCs
        vmem_limit_bytes=32 * 1024 * 1024,
    )

    if train and dropout_p > 0.0:
        assert 0.0 < dropout_p < 1.0, "dropout_p must be in (0, 1) for training mode"
        if rng_key is None:
            rng_key = jax.random.PRNGKey(0)
        bits = jax.random.bits(rng_key, (S, B * D), dtype=jnp.uint32)
        kernel = functools.partial(_pe_add_dropout_kernel, batch=B,
                                   dropout_p=float(dropout_p))
        out2d = pl.pallas_call(
            kernel,
            out_shape=out_shape,
            grid=grid,
            in_specs=[x_spec, pe_spec, bits_spec],
            out_specs=out_spec,
            compiler_params=compiler_params,
        )(x2d, pe2d, bits)
    else:
        kernel = functools.partial(_pe_add_kernel, batch=B)
        out2d = pl.pallas_call(
            kernel,
            out_shape=out_shape,
            grid=grid,
            in_specs=[x_spec, pe_spec],
            out_specs=out_spec,
            compiler_params=compiler_params,
        )(x2d, pe2d)

    return out2d.reshape(S, B, D)


# ---------------------------------------------------------------------------
# Demo / self-test
# ---------------------------------------------------------------------------
if __name__ == "__main__":
    dim_model = 32
    max_len = 16
    dropout_p = 0.1
    seq_len, batch = 8, 2

    key = jax.random.PRNGKey(0)
    x = jax.random.normal(key, (seq_len, batch, dim_model), dtype=jnp.float32)

    pos_encoding = make_pos_encoding(dim_model, max_len)      # (max_len, 1, dim_model)
    ref = x + pos_encoding[:seq_len]                          # reference (eval mode)

    # Eval-mode forward (dropout = identity) — bit-for-bit comparable.
    out_eval = positional_encoding_forward(
        x, pos_encoding, dropout_p=dropout_p, train=False
    )
    out_eval = jax.block_until_ready(out_eval)
    assert out_eval.shape == (seq_len, batch, dim_model)
    assert jnp.allclose(out_eval, ref, atol=1e-6, rtol=1e-6)

    # Training-mode forward (dropout via integer-threshold compare).
    out_train = positional_encoding_forward(
        x, pos_encoding, dropout_p=dropout_p, train=True,
        rng_key=jax.random.PRNGKey(1234),
    )
    out_train = jax.block_until_ready(out_train)
    assert out_train.shape == (seq_len, batch, dim_model)
    # Every surviving element must equal ref / (1 - p); dropped elements are 0.
    scale = 1.0 / (1.0 - dropout_p)
    kept = out_train != 0
    assert jnp.allclose(jnp.where(kept, out_train, 0.0),
                        jnp.where(kept, ref * scale, 0.0),
                        atol=1e-5, rtol=1e-5)

    print("KERNEL_OK")
</pallas_src>

<mosaic_0001>
module attributes {stable_mosaic.version = 11 : i64} {
  func.func @_pe_add_kernel(%arg0: i32, %arg1: memref<8x64xf32, #tpu.memory_space<vmem>>, %arg2: memref<8x32xf32, #tpu.memory_space<vmem>>, %arg3: memref<8x64xf32, #tpu.memory_space<vmem>>) attributes {dimension_semantics = [#tpu.dimension_semantics<parallel>], iteration_bounds = array<i64: 1>, scalar_prefetch = 0 : i64, scratch_operands = 0 : i64, tpu.core_type = #tpu.core_type<tc>, window_params = [{transform_indices = @transform_0, window_bounds = array<i64: 8, 64>}, {transform_indices = @transform_1, window_bounds = array<i64: 8, 32>}, {transform_indices = @transform_2, window_bounds = array<i64: 8, 64>}]} {
    %c0 = arith.constant 0 : index
    %c0_0 = arith.constant 0 : index
    %0 = vector.load %arg2[%c0, %c0_0] : memref<8x32xf32, #tpu.memory_space<vmem>>, vector<8x32xf32>
    %1 = tpu.concatenate %0, %0 in 1 : vector<8x32xf32>, vector<8x32xf32> -> vector<8x64xf32>
    %c0_1 = arith.constant 0 : index
    %c0_2 = arith.constant 0 : index
    %2 = vector.load %arg1[%c0_1, %c0_2] : memref<8x64xf32, #tpu.memory_space<vmem>>, vector<8x64xf32>
    %3 = arith.addf %2, %1 : vector<8x64xf32>
    %c0_3 = arith.constant 0 : index
    %c0_4 = arith.constant 0 : index
    %4 = vector.load %arg3[%c0_3, %c0_4] : memref<8x64xf32, #tpu.memory_space<vmem>>, vector<8x64xf32>
    tpu.vector_store %arg3[%c0_3, %c0_4], %3 {strides = array<i32>} : memref<8x64xf32, #tpu.memory_space<vmem>>, vector<8x64xf32>,
    return
  }
  func.func @transform_0(%arg0: i32) -> (i32, i32) {
    %c0_i32 = arith.constant 0 : i32
    %c0_i32_0 = arith.constant 0 : i32
    return %arg0, %c0_i32 : i32, i32
  }
  func.func @transform_1(%arg0: i32) -> (i32, i32) {
    %c0_i32 = arith.constant 0 : i32
    %c0_i32_0 = arith.constant 0 : i32
    return %arg0, %c0_i32 : i32, i32
  }
  func.func @transform_2(%arg0: i32) -> (i32, i32) {
    %c0_i32 = arith.constant 0 : i32
    %c0_i32_0 = arith.constant 0 : i32
    return %arg0, %c0_i32 : i32, i32
  }
}

</mosaic_0001>

<llo_original>
// kernel: tpu_custom_call.1
$region0: #{tpu_custom_call.1}
  #allocation0 [shape = 'u32[]', space=smem, size = 0x4, offset = 0x4, fixed_abs, tag = 'smem constant byte address 0x4 - core index']
  #allocation1 [shape = 'u32[144,128]{1,0:T(1,128)}', space=vmem, size = 0x12000, scoped, tag = 'internal scratch']
  %s0 = inlined_call_operand.hbm [shape: f32[8,64], index: 0, kind: input, shape index: {}]
  %s1 = inlined_call_operand.hbm [shape: f32[8,32], index: 1, kind: input, shape index: {}]
  %s2 = inlined_call_operand.hbm [shape: f32[8,64], index: 2, kind: output, shape index: {}]
  %s3 = sld [smem:[#allocation0]]
  $region26: #{tpu_custom_call.1} parent=0
    _
  %s5 = ssub.s32 1, %s3
  %s6 = scalar_select 0, %s5, %s3
  $region1: #{tpu_custom_call.1} parent=0
    #allocation2 [shape = 'u8[4096]{0}', space=vmem, size = 0x1000, scoped, tag = 'input window, operand 0, single buffered']
    #allocation3 [shape = 's32[1]{0}', space=sflag, size = 0x4, scoped, tag = 'scoped memory for tpu_custom_call.1']
    #allocation4 [shape = 's32[1]{0}', space=sflag, size = 0x4, scoped, tag = 'scoped memory for tpu_custom_call.1']
    #allocation5 [shape = 'u8[4096]{0}', space=vmem, size = 0x1000, scoped, tag = 'input window, operand 1, single buffered']
    #allocation6 [shape = 's32[1]{0}', space=sflag, size = 0x4, scoped, tag = 'scoped memory for tpu_custom_call.1']
    #allocation7 [shape = 'u8[4096]{0}', space=vmem, size = 0x1000, scoped, tag = 'output window, operand 0, single buffered']
    %7 = vsyncpa [#allocation3], 0
    %8 = vsyncpa [#allocation6], 0
    %9 = vsyncpa [#allocation4], 0
    // Predicated region
    $region2: #{tpu_custom_call.1} parent=1 // pred_check
      _
    $region3: #{tpu_custom_call.1} parent=1 // pred_check_branch
      %11 = sbr.rel (0) target = $region5
    $region4: #{tpu_custom_call.1} parent=1 // pred_region
      %s13 = ssub.s32 128, 128
      %14 = vsyncadd [#allocation3], %s13
      %s16 = sshll.u32 [#allocation2], 4
      %s17 = int_to_ptr.vmem [resolvable:$true] %s16
      %19 = dma.hbm_to_vmem [thread:$0]  %s0, 128, %s17, [#allocation3]
    $region5: #{tpu_custom_call.1} parent=1 // pred_fallthru
      _
    // Predicated region
    $region6: #{tpu_custom_call.1} parent=1 // pred_check
      _
    $region7: #{tpu_custom_call.1} parent=1 // pred_check_branch
      %21 = sbr.rel (0) target = $region9
    $region8: #{tpu_custom_call.1} parent=1 // pred_region
      %s23 = ssub.s32 128, 128
      %24 = vsyncadd [#allocation6], %s23
      %s26 = sshll.u32 [#allocation5], 4
      %s27 = int_to_ptr.vmem [resolvable:$true] %s26
      %29 = dma.hbm_to_vmem [thread:$0]  %s1, 128, %s27, [#allocation6]
    $region9: #{tpu_custom_call.1} parent=1 // pred_fallthru
      _
    // Predicated region
    $region10: #{tpu_custom_call.1} parent=1 // pred_check
      _
    $region11: #{tpu_custom_call.1} parent=1 // pred_check_branch
      %31 = sbr.rel (0) target = $region13
    $region12: #{tpu_custom_call.1} parent=1 // pred_region
      %32 = dma.done [#allocation3], 128
    $region13: #{tpu_custom_call.1} parent=1 // pred_fallthru
      _
    // Predicated region
    $region14: #{tpu_custom_call.1} parent=1 // pred_check
      _
    $region15: #{tpu_custom_call.1} parent=1 // pred_check_branch
      %34 = sbr.rel (0) target = $region17
    $region16: #{tpu_custom_call.1} parent=1 // pred_region
      %35 = dma.done [#allocation6], 128
    $region17: #{tpu_custom_call.1} parent=1 // pred_fallthru
      _
    %v36 = vld [vmem:[#allocation5] sm:$0xff]
    %38 = vrot.lane.b32.xlu0 %v36, 32
    %v39 = vpop.permute.xlu0 %38
    %vm41 = vcmask 261120
    %v42 = vsel %vm41, %v36, %v39
    %v43 = vld [vmem:[#allocation2] sm:$0xff]
    %v44 = vadd.f32 %v43, %v42
    %vm45 = vcmask 523264
    %46 = vst.msk [vmem:[#allocation7] sm:$0xff] %vm45, %v44
    // Predicated region
    $region18: #{tpu_custom_call.1} parent=1 // pred_check
      _
    $region19: #{tpu_custom_call.1} parent=1 // pred_check_branch
      %48 = sbr.rel (0) target = $region21
    $region20: #{tpu_custom_call.1} parent=1 // pred_region
      %s50 = ssub.s32 128, 128
      %51 = vsyncadd [#allocation4], %s50
      %s53 = sshll.u32 [#allocation7], 4
      %s54 = int_to_ptr.vmem [resolvable:$true] %s53
      %56 = dma.vmem_to_hbm [thread:$0]  %s54, 128, %s2, [#allocation4]
    $region21: #{tpu_custom_call.1} parent=1 // pred_fallthru
      _
    // Predicated region
    $region22: #{tpu_custom_call.1} parent=1 // pred_check
      _
    $region23: #{tpu_custom_call.1} parent=1 // pred_check_branch
      %58 = sbr.rel (0) target = $region25
    $region24: #{tpu_custom_call.1} parent=1 // pred_region
      %59 = dma.done [#allocation4], 128
    $region25: #{tpu_custom_call.1} parent=1 // pred_fallthru
      _
    %60 = vsyncpa [#allocation3], 1
    %61 = vsyncpa [#allocation6], 1
    %62 = vsyncpa [#allocation4], 1

</llo_original>
